<compile_context>
chip_gen: v7x
topology: tpu7x:2x2x1
jax: 0.10.0
libtpu: 0.0.40
codegen_flags: <defaults>
</compile_context>

<pallas_src>
import functools

import jax
import jax.numpy as jnp
from jax.experimental import pallas as pl
from jax.experimental.pallas import tpu as pltpu


# ----------------------------------------------------------------------------
# Kernel 1: stand-in encoder (3x3 conv + bias + ReLU) fused with global avg pool
# ----------------------------------------------------------------------------
def _conv_pool_kernel(patch_ref, cw_ref, cb_ref, feat_ref, pooled_ref, *, inv_hw):
    # patch_ref:  (1, 1, TH*W, K_pad)  im2col'd input rows, bf16 (lane-dense K)
    # cw_ref:     (K_pad, F)           conv weight, (kh,kw,C) row order, zero-padded, bf16
    # cb_ref:     (1, F)               conv bias, f32
    # feat_ref:   (1, TH*W, F)         feature tile (channels-last), bf16
    # pooled_ref: (1, 1, F)            resident f32 accumulator -> global average pool
    ht = pl.program_id(1)
    n_ht = pl.num_programs(1)

    # Single K=K_pad MXU matmul per tile (replaces nine K=C tap matmuls + relayouts).
    acc = jnp.dot(patch_ref[0, 0], cw_ref[...],
                  preferred_element_type=jnp.float32)          # (TH*W, F) f32
    feat = jnp.maximum(acc + cb_ref[...], 0.0)                 # f32 bias + ReLU epilogue
    feat_ref[0] = feat.astype(feat_ref.dtype)                  # lane-dense bf16 store

    # AdaptiveAvgPool2d(1): accumulate the spatial sum in the resident output block.
    @pl.when(ht == 0)
    def _init():
        pooled_ref[...] = jnp.zeros_like(pooled_ref)

    pooled_ref[0] += jnp.sum(feat, axis=0, keepdims=True)      # (1, F) sublane reduce

    @pl.when(ht == n_ht - 1)
    def _finalize():
        pooled_ref[0] = pooled_ref[0] * inv_hw                 # mean


# ----------------------------------------------------------------------------
# Kernel 2: all task heads as one batched (B, F) x (F, Npad) matmul, f32
# (dropout p=0.0 in eval mode is the identity, so heads act directly on pooled)
# ----------------------------------------------------------------------------
def _head_kernel(pooled_ref, hw_ref, hb_ref, logits_ref):
    logits_ref[...] = (
        jnp.dot(pooled_ref[...], hw_ref[...], preferred_element_type=jnp.float32)
        + hb_ref[...]
    )


# ----------------------------------------------------------------------------
# Tiling heuristic
# ----------------------------------------------------------------------------
def _select_row_tile(H, W, C, F):
    """Largest TH dividing H whose per-step VMEM footprint fits the budget."""
    k_pad = max(128, ((9 * C + 127) // 128) * 128)
    budget = 8 * 1024 * 1024                 # leaves headroom even on v7x (64 MiB/TC)
    for d in range(H, 0, -1):
        if H % d:
            continue
        rows = d * W
        if rows % 8 and d != H:
            continue
        # double-buffered bf16 patch + bf16 feat blocks + f32 intermediates (rough)
        tile_bytes = rows * (4 * k_pad + 4 * F + 4 * F)
        if tile_bytes <= budget:
            return d
    return H


# ----------------------------------------------------------------------------
# Wrapper
# ----------------------------------------------------------------------------
def joint_classification_forward(x, params, num_class_per_task):
    """JointClassificationModel.forward (eval mode, dropout p=0.0).

    x: (B, C, H, W) NCHW (PyTorch layout).
    Returns (feat_maps, logits_dict, pooled).  feat_maps are channels-last bf16
    (B, H, W, F): the same tensor as PyTorch's (B, F, H, W), axes permuted
    (NCHW output transpose and f32 writeback dropped per the perf review).
    """
    B, C, H, W = x.shape
    F = params["conv_w"].shape[0]
    K = 9 * C
    K_pad = max(128, ((K + 127) // 128) * 128)   # lane-dense patch / MXU-friendly K
    TH = _select_row_tile(H, W, C, F)
    n_ht = H // TH
    HW = H * W

    # --- wrapper-side im2col (cheap on the tiny low-channel input):
    #     padded NHWC + 9 shifted views -> (B, n_ht, TH*W, K_pad) bf16, lane-dense.
    x_nhwc = jnp.transpose(x, (0, 2, 3, 1)).astype(jnp.float32)
    xp = jnp.pad(x_nhwc, ((0, 0), (1, 1), (1, 1), (0, 0)))
    taps = [xp[:, kh:kh + H, kw:kw + W, :] for kh in range(3) for kw in range(3)]
    patches = jnp.concatenate(taps, axis=-1)                      # (B, H, W, 9C)
    patches = jnp.pad(patches, ((0, 0), (0, 0), (0, 0), (0, K_pad - K)))
    patches = patches.reshape(B, n_ht, TH * W, K_pad).astype(jnp.bfloat16)

    # Conv weight (F, C, 3, 3) -> (K_pad, F), rows in (kh, kw, C) order, bf16.
    cw_rows = jnp.transpose(params["conv_w"], (2, 3, 1, 0)).reshape(K, F)
    cw = jnp.zeros((K_pad, F), jnp.bfloat16).at[:K, :].set(cw_rows.astype(jnp.bfloat16))
    cb = params["conv_b"].reshape(1, F).astype(jnp.float32)

    # Concatenate all task heads; pad the class dim to a lane-dense multiple of 128.
    task_names = list(num_class_per_task.keys())
    w_all = jnp.concatenate([params["heads"][t]["w"].T for t in task_names], axis=1)
    b_all = jnp.concatenate([params["heads"][t]["b"] for t in task_names], axis=0)
    n_total = int(w_all.shape[1])
    n_pad = max(128, ((n_total + 127) // 128) * 128)
    hw_mat = jnp.zeros((F, n_pad), jnp.float32).at[:, :n_total].set(
        w_all.astype(jnp.float32))
    hb_mat = jnp.zeros((1, n_pad), jnp.float32).at[:, :n_total].set(
        b_all.astype(jnp.float32))

    kernel = functools.partial(_conv_pool_kernel, inv_hw=1.0 / HW)

    conv_flops = 2 * B * HW * K_pad * F
    conv_bytes = (patches.size * 2 + cw.size * 2 + cb.size * 4
                  + B * HW * F * 2 + B * F * 4)

    feat_flat, pooled3 = pl.pallas_call(
        kernel,
        out_shape=(
            jax.ShapeDtypeStruct((B, HW, F), jnp.bfloat16),   # bf16 writeback (review)
            jax.ShapeDtypeStruct((B, 1, F), jnp.float32),
        ),
        grid_spec=pltpu.PrefetchScalarGridSpec(
            num_scalar_prefetch=0,
            # NOTE: if B == 1 on v7x, split n_ht into an outer "parallel" factor with a
            # cross-core partial pooled-sum combine so both TensorCores get work.
            grid=(B, n_ht),
            in_specs=[
                pl.BlockSpec((1, 1, TH * W, K_pad), lambda b, ht: (b, ht, 0, 0)),
                pl.BlockSpec((K_pad, F), lambda b, ht: (0, 0)),
                pl.BlockSpec((1, F), lambda b, ht: (0, 0)),
            ],
            out_specs=(
                pl.BlockSpec((1, TH * W, F), lambda b, ht: (b, ht, 0)),
                pl.BlockSpec((1, 1, F), lambda b, ht: (b, 0, 0)),   # resident accumulator
            ),
        ),
        compiler_params=pltpu.CompilerParams(
            dimension_semantics=("parallel", "arbitrary"),
            vmem_limit_bytes=16 * 1024 * 1024,   # right-sized (v7x TC = 64 MiB total)
        ),
        cost_estimate=pl.CostEstimate(
            flops=conv_flops, transcendentals=0, bytes_accessed=conv_bytes),
    )(patches, cw, cb)

    pooled = pooled3.reshape(B, F)

    # --- all task heads, hoisted out of the tile loop: one (B,F)x(F,Npad) f32 matmul.
    logits_pad = pl.pallas_call(
        _head_kernel,
        out_shape=jax.ShapeDtypeStruct((B, n_pad), jnp.float32),
        grid_spec=pltpu.PrefetchScalarGridSpec(
            num_scalar_prefetch=0,
            grid=(1,),
            in_specs=[
                pl.BlockSpec((B, F), lambda i: (0, 0)),
                pl.BlockSpec((F, n_pad), lambda i: (0, 0)),
                pl.BlockSpec((1, n_pad), lambda i: (0, 0)),
            ],
            out_specs=pl.BlockSpec((B, n_pad), lambda i: (0, 0)),
        ),
        compiler_params=pltpu.CompilerParams(
            dimension_semantics=("arbitrary",)),
        cost_estimate=pl.CostEstimate(
            flops=2 * B * F * n_pad, transcendentals=0,
            bytes_accessed=B * F * 4 + F * n_pad * 4 + n_pad * 4 + B * n_pad * 4),
    )(pooled, hw_mat, hb_mat)

    feat_maps = feat_flat.reshape(B, H, W, F)     # channels-last, F lane-dense, bf16
    logits_all = logits_pad[:, :n_total]

    logits = {}
    off = 0
    for t in task_names:
        n = num_class_per_task[t]
        logits[t] = logits_all[:, off:off + n]
        off += n
    return feat_maps, logits, pooled


# ----------------------------------------------------------------------------
# Deterministic parameter construction
# ----------------------------------------------------------------------------
def make_params(key, n_channels, encoder_out_channels, num_class_per_task):
    k_cw, k_cb, k_h = jax.random.split(key, 3)
    conv_w = 0.05 * jax.random.normal(
        k_cw, (encoder_out_channels, n_channels, 3, 3), jnp.float32)
    conv_b = 0.01 * jax.random.normal(k_cb, (encoder_out_channels,), jnp.float32)

    heads = {}
    hkeys = jax.random.split(k_h, len(num_class_per_task))
    for hk, (task, n_cls) in zip(hkeys, num_class_per_task.items()):
        kw, kb = jax.random.split(hk)
        heads[task] = {
            # nn.Linear(in=encoder_out_channels, out=n_cls): weight (n_cls, in)
            "w": 0.05 * jax.random.normal(kw, (n_cls, encoder_out_channels),
                                          jnp.float32),
            "b": 0.01 * jax.random.normal(kb, (n_cls,), jnp.float32),
        }
    return {"conv_w": conv_w, "conv_b": conv_b, "heads": heads}


# ----------------------------------------------------------------------------
# Main
# ----------------------------------------------------------------------------
if __name__ == "__main__":
    B, C, H, W = 2, 4, 16, 16
    ENCODER_OUT_CHANNELS = 128     # lane-dense stand-in (real backbones: 1024/2048)
    num_class_per_task = {"task_a": 3, "task_b": 5}

    key = jax.random.PRNGKey(0)
    k_x, k_p = jax.random.split(key)
    x = jax.random.normal(k_x, (B, C, H, W), jnp.float32)
    params = make_params(k_p, C, ENCODER_OUT_CHANNELS, num_class_per_task)

    feat_maps, logits, pooled = joint_classification_forward(
        x, params, num_class_per_task)

    jax.block_until_ready(feat_maps)
    jax.block_until_ready(pooled)
    for t in logits:
        jax.block_until_ready(logits[t])

    # plain-JAX f32 reference (kernel conv runs in bf16 / bf16 feat writeback
    # -> loose tolerances)
    ref_feat = jax.lax.conv_general_dilated(
        x, params["conv_w"], window_strides=(1, 1), padding=((1, 1), (1, 1)),
        dimension_numbers=("NCHW", "OIHW", "NCHW"))
    ref_feat = jnp.maximum(ref_feat + params["conv_b"][None, :, None, None], 0.0)
    ref_feat_nhwc = jnp.transpose(ref_feat, (0, 2, 3, 1))          # (B, H, W, F)
    ref_pooled = jnp.mean(ref_feat_nhwc, axis=(1, 2))              # (B, F)

    ok = bool(jnp.allclose(feat_maps.astype(jnp.float32), ref_feat_nhwc,
                           atol=3e-2, rtol=3e-2))
    ok &= bool(jnp.allclose(pooled, ref_pooled, atol=3e-2, rtol=3e-2))
    for t, n in num_class_per_task.items():
        ref_l = ref_pooled @ params["heads"][t]["w"].T + params["heads"][t]["b"]
        ok &= bool(jnp.allclose(logits[t], ref_l, atol=3e-2, rtol=3e-2))
        assert logits[t].shape == (B, n)
    assert feat_maps.shape == (B, H, W, ENCODER_OUT_CHANNELS)
    assert pooled.shape == (B, ENCODER_OUT_CHANNELS)
    assert ok, "mismatch vs. plain-JAX reference"

    print("KERNEL_OK")
</pallas_src>

<mosaic_0001>
module attributes {stable_mosaic.version = 11 : i64} {
  func.func @_conv_pool_kernel(%arg0: i32, %arg1: i32, %arg2: memref<1x1x256x128xbf16, #tpu.memory_space<vmem>>, %arg3: memref<128x128xbf16, #tpu.memory_space<vmem>>, %arg4: memref<1x128xf32, #tpu.memory_space<vmem>>, %arg5: memref<1x256x128xbf16, #tpu.memory_space<vmem>>, %arg6: memref<1x1x128xf32, #tpu.memory_space<vmem>>) attributes {dimension_semantics = [#tpu.dimension_semantics<parallel>, #tpu.dimension_semantics<arbitrary>], iteration_bounds = array<i64: 2, 1>, scalar_prefetch = 0 : i64, scratch_operands = 0 : i64, tpu.core_type = #tpu.core_type<tc>, window_params = [{transform_indices = @transform_0, window_bounds = array<i64: 1, 1, 256, 128>}, {pipeline_mode = #tpu.pipeline_mode<synchronous>, transform_indices = @transform_1, window_bounds = array<i64: 128, 128>}, {pipeline_mode = #tpu.pipeline_mode<synchronous>, transform_indices = @transform_2, window_bounds = array<i64: 1, 128>}, {transform_indices = @transform_3, window_bounds = array<i64: 1, 256, 128>}, {transform_indices = @transform_4, window_bounds = array<i64: 1, 1, 128>}]} {
    %c0 = arith.constant 0 : index
    %c0_0 = arith.constant 0 : index
    %c0_1 = arith.constant 0 : index
    %c0_2 = arith.constant 0 : index
    %0 = vector.load %arg2[%c0, %c0_0, %c0_1, %c0_2] : memref<1x1x256x128xbf16, #tpu.memory_space<vmem>>, vector<1x1x256x128xbf16>
    %1 = vector.shape_cast %0 : vector<1x1x256x128xbf16> to vector<256x128xbf16>
    %c0_3 = arith.constant 0 : index
    %c0_4 = arith.constant 0 : index
    %2 = vector.load %arg3[%c0_3, %c0_4] : memref<128x128xbf16, #tpu.memory_space<vmem>>, vector<128x128xbf16>
    %cst = arith.constant dense<0.000000e+00> : vector<256x128xf32>
    %3 = tpu.matmul %1, %2, %cst {dimension_numbers = #tpu.dot_dimension_numbers<[1], [0], [0], [1], [0, 0, 1, 1], [], []>} : vector<256x128xbf16>, vector<128x128xbf16>, vector<256x128xf32> -> vector<256x128xf32>
    %c0_5 = arith.constant 0 : index
    %c0_6 = arith.constant 0 : index
    %4 = vector.load %arg4[%c0_5, %c0_6] : memref<1x128xf32, #tpu.memory_space<vmem>>, vector<1x128xf32>
    %5 = vector.broadcast %4 : vector<1x128xf32> to vector<256x128xf32>
    %6 = arith.addf %3, %5 : vector<256x128xf32>
    %cst_7 = arith.constant 0.000000e+00 : f32
    %7 = vector.broadcast %cst_7 : f32 to vector<256x128xf32>
    %8 = arith.maximumf %6, %7 : vector<256x128xf32>
    %9 = arith.truncf %8 : vector<256x128xf32> to vector<256x128xbf16>
    %c0_8 = arith.constant 0 : index
    %c0_9 = arith.constant 0 : index
    %c0_10 = arith.constant 0 : index
    %10 = vector.load %arg5[%c0_8, %c0_9, %c0_10] : memref<1x256x128xbf16, #tpu.memory_space<vmem>>, vector<1x256x128xbf16>
    %11 = vector.shape_cast %10 : vector<1x256x128xbf16> to vector<256x128xbf16>
    %12 = vector.shape_cast %9 : vector<256x128xbf16> to vector<1x256x128xbf16>
    tpu.vector_store %arg5[%c0_8, %c0_9, %c0_10], %12 {strides = array<i32>} : memref<1x256x128xbf16, #tpu.memory_space<vmem>>, vector<1x256x128xbf16>,
    %c0_i32 = arith.constant 0 : i32
    %13 = arith.cmpi eq, %arg1, %c0_i32 : i32
    %14 = arith.extui %13 : i1 to i32
    %c0_i32_11 = arith.constant 0 : i32
    %15 = arith.cmpi ne, %14, %c0_i32_11 : i32
    scf.if %15 {
      %cst_21 = arith.constant 0.000000e+00 : f32
      %27 = vector.broadcast %cst_21 : f32 to vector<1x1x128xf32>
      %c0_22 = arith.constant 0 : index
      %c0_23 = arith.constant 0 : index
      %c0_24 = arith.constant 0 : index
      %28 = vector.load %arg6[%c0_22, %c0_23, %c0_24] : memref<1x1x128xf32, #tpu.memory_space<vmem>>, vector<1x1x128xf32>
      tpu.vector_store %arg6[%c0_22, %c0_23, %c0_24], %27 {strides = array<i32>} : memref<1x1x128xf32, #tpu.memory_space<vmem>>, vector<1x1x128xf32>,
    } else {
    }
    %c0_12 = arith.constant 0 : index
    %c0_13 = arith.constant 0 : index
    %c0_14 = arith.constant 0 : index
    %16 = vector.load %arg6[%c0_12, %c0_13, %c0_14] : memref<1x1x128xf32, #tpu.memory_space<vmem>>, vector<1x1x128xf32>
    %17 = vector.shape_cast %16 : vector<1x1x128xf32> to vector<1x128xf32>
    %cst_15 = arith.constant dense<0.000000e+00> : vector<128xf32>
    %18 = vector.multi_reduction <add>, %8, %cst_15 [0] : vector<256x128xf32> to vector<128xf32>
    %19 = vector.shape_cast %18 : vector<128xf32> to vector<1x128xf32>
    %20 = arith.addf %17, %19 : vector<1x128xf32>
    %c0_16 = arith.constant 0 : index
    %c0_17 = arith.constant 0 : index
    %c0_18 = arith.constant 0 : index
    %21 = vector.load %arg6[%c0_16, %c0_17, %c0_18] : memref<1x1x128xf32, #tpu.memory_space<vmem>>, vector<1x1x128xf32>
    %22 = vector.shape_cast %21 : vector<1x1x128xf32> to vector<1x128xf32>
    %23 = vector.shape_cast %20 : vector<1x128xf32> to vector<1x1x128xf32>
    tpu.vector_store %arg6[%c0_16, %c0_17, %c0_18], %23 {strides = array<i32>} : memref<1x1x128xf32, #tpu.memory_space<vmem>>, vector<1x1x128xf32>,
    %c0_i32_19 = arith.constant 0 : i32
    %24 = arith.cmpi eq, %arg1, %c0_i32_19 : i32
    %25 = arith.extui %24 : i1 to i32
    %c0_i32_20 = arith.constant 0 : i32
    %26 = arith.cmpi ne, %25, %c0_i32_20 : i32
    scf.if %26 {
      %c0_21 = arith.constant 0 : index
      %c0_22 = arith.constant 0 : index
      %c0_23 = arith.constant 0 : index
      %27 = vector.load %arg6[%c0_21, %c0_22, %c0_23] : memref<1x1x128xf32, #tpu.memory_space<vmem>>, vector<1x1x128xf32>
      %28 = vector.shape_cast %27 : vector<1x1x128xf32> to vector<1x128xf32>
      %cst_24 = arith.constant 3.906250e-03 : f32
      %29 = vector.broadcast %cst_24 : f32 to vector<1x128xf32>
      %30 = arith.mulf %28, %29 : vector<1x128xf32>
      %c0_25 = arith.constant 0 : index
      %c0_26 = arith.constant 0 : index
      %c0_27 = arith.constant 0 : index
      %31 = vector.load %arg6[%c0_25, %c0_26, %c0_27] : memref<1x1x128xf32, #tpu.memory_space<vmem>>, vector<1x1x128xf32>
      %32 = vector.shape_cast %31 : vector<1x1x128xf32> to vector<1x128xf32>
      %33 = vector.shape_cast %30 : vector<1x128xf32> to vector<1x1x128xf32>
      tpu.vector_store %arg6[%c0_25, %c0_26, %c0_27], %33 {strides = array<i32>} : memref<1x1x128xf32, #tpu.memory_space<vmem>>, vector<1x1x128xf32>,
    } else {
    }
    return
  }
  func.func @transform_0(%arg0: i32, %arg1: i32) -> (i32, i32, i32, i32) {
    %c0_i32 = arith.constant 0 : i32
    %c0_i32_0 = arith.constant 0 : i32
    %c0_i32_1 = arith.constant 0 : i32
    return %arg0, %arg1, %c0_i32, %c0_i32_0 : i32, i32, i32, i32
  }
  func.func @transform_1(%arg0: i32, %arg1: i32) -> (i32, i32) {
    %c0_i32 = arith.constant 0 : i32
    %c0_i32_0 = arith.constant 0 : i32
    %c0_i32_1 = arith.constant 0 : i32
    return %c0_i32, %c0_i32_0 : i32, i32
  }
  func.func @transform_2(%arg0: i32, %arg1: i32) -> (i32, i32) {
    %c0_i32 = arith.constant 0 : i32
    %c0_i32_0 = arith.constant 0 : i32
    %c0_i32_1 = arith.constant 0 : i32
    return %c0_i32, %c0_i32_0 : i32, i32
  }
  func.func @transform_3(%arg0: i32, %arg1: i32) -> (i32, i32, i32) {
    %c0_i32 = arith.constant 0 : i32
    %c0_i32_0 = arith.constant 0 : i32
    return %arg0, %arg1, %c0_i32 : i32, i32, i32
  }
  func.func @transform_4(%arg0: i32, %arg1: i32) -> (i32, i32, i32) {
    %c0_i32 = arith.constant 0 : i32
    %c0_i32_0 = arith.constant 0 : i32
    %c0_i32_1 = arith.constant 0 : i32
    return %arg0, %c0_i32, %c0_i32_0 : i32, i32, i32
  }
}

</mosaic_0001>

<llo_original>
// kernel: tpu_custom_call.1
$region0: #{tpu_custom_call.1}
  #allocation0 [shape = 'u32[]', space=smem, size = 0x4, offset = 0x4, fixed_abs, tag = 'smem constant byte address 0x4 - core index']
  #allocation1 [shape = 'u32[144,128]{1,0:T(1,128)}', space=vmem, size = 0x12000, scoped, tag = 'internal scratch']
  %s0 = inlined_call_operand.hbm [shape: bf16[2,1,256,128], index: 0, kind: input, shape index: {}]
  %s1 = inlined_call_operand.hbm [shape: bf16[128,128], index: 1, kind: input, shape index: {}]
  %s2 = inlined_call_operand.vmem [shape: f32[1,128], index: 2, kind: input, shape index: {}]
  %s3 = inlined_call_operand.hbm [shape: bf16[2,256,128], index: 3, kind: output, shape index: {0}]
  %s4 = inlined_call_operand.hbm [shape: f32[2,1,128], index: 4, kind: output, shape index: {1}]
  %5 = xla_tuple %s3, %s4
  %s6 = sld [smem:[#allocation0]]
  $region69: #{tpu_custom_call.1} parent=0
    _
  %s8 = ssub.s32 1, %s6
  %s9 = scalar_select 0, %s8, %s6
  $region1: #{tpu_custom_call.1} parent=0
    #allocation2 [shape = 'u8[131072]{0}', space=vmem, size = 0x20000, scoped, tag = 'input window, operand 0']
    #allocation3 [shape = 's32[2]{0}', space=sflag, size = 0x8, scoped, tag = 'scoped memory for tpu_custom_call.1']
    #allocation4 [shape = 's32[2]{0}', space=sflag, size = 0x8, scoped, tag = 'scoped memory for tpu_custom_call.1']
    #allocation5 [shape = 'u8[32768]{0}', space=vmem, size = 0x8000, scoped, tag = 'input window, operand 1, single buffered']
    #allocation6 [shape = 's32[1]{0}', space=sflag, size = 0x4, scoped, tag = 'scoped memory for tpu_custom_call.1']
    #allocation7 [shape = 'u8[131072]{0}', space=vmem, size = 0x20000, scoped, tag = 'output window, operand 0']
    #allocation8 [shape = 'u8[1024]{0}', space=vmem, size = 0x400, scoped, tag = 'output window, operand 1']
    #allocation9 [shape = 's32[2]{0}', space=sflag, size = 0x8, scoped, tag = 'scoped memory for tpu_custom_call.1']
    %10 = vsyncpa [#allocation3], 0
    %s11 = scalar_lea.sflag [#allocation3], 1
    %12 = vsyncpa %s11, 0
    %13 = vsyncpa [#allocation6], 0
    %14 = vsyncpa [#allocation4], 0
    %s15 = scalar_lea.sflag [#allocation4], 1
    %16 = vsyncpa %s15, 0
    %17 = vsyncpa [#allocation9], 0
    %s18 = scalar_lea.sflag [#allocation9], 1
    %19 = vsyncpa %s18, 0
    loop: start=0, step=1, limit=4
    $region2: #{tpu_custom_call.1} parent=1 // loop_pre_header
      _
    $region3: #{tpu_custom_call.1} parent=1 // loop_header
      %s21 = sphi 0, %s25
      %p22 = scmp.ge.s32.totalorder %s21, 4
      %s28 = sphi 0, %s40
      %s29 = sphi 0, %s36
      %s30 = sphi 0, %s28
      %s31 = sphi 0, %s29
      %s32 = sphi 0, %s30
      %s33 = sphi 0, %s31
      %s45 = sphi 0, %s47
      %s48 = sphi 0, %s45
      %s49 = sphi 0, %s48
      %s65 = sphi 0, %s49
      %s69 = sphi 0, %s69
      %s71 = sphi 0, %s69
      %s72 = sphi 0, %s71
      %s86 = sphi 0, %s72
      %s90 = sphi 0, %s90
      %s92 = sphi 0, %s90
      %s93 = sphi 0, %s92
      %s107 = sphi 0, %s93
      %s115 = sphi 0, %s117
      %s118 = sphi 0, %s115
      %s119 = sphi 0, %s118
      %s135 = sphi 0, %s119
      %s141 = sphi 0, %s143
      %s144 = sphi 0, %s141
      %s145 = sphi 0, %s144
      %s161 = sphi 0, %s145
    $region4: #{tpu_custom_call.1} parent=1 // loop_header_branch
      %24 = sbr.rel (%p22) target = $region8
    $region5: #{tpu_custom_call.1} parent=1 // loop_body
      %s26 = ssub.s32 %s21, 1
      %s27 = ssub.s32 %s21, 2
      %s34 = sadd.s32 1, %s29
      %p35 = scmp.ge.s32.totalorder %s34, 1
      %s36 = scalar_select %p35, 0, %s34
      %s37 = sadd.s32 1, %s28
      %s38 = scalar_select %p35, %s37, %s28
      %p39 = scmp.ge.s32.totalorder %s38, 2
      %s40 = scalar_select %p39, 0, %s38
      %s41 = ssub.s32 %s28, %s40
      %s42 = ssub.s32 %s29, %s36
      %s43 = sor.u32 %s41, %s42
      %p44 = scmp.eq.s32.totalorder %s43, 0
      %s46 = sadd.s32 %s45, 1
      %s47 = scalar_select %p44, %s45, %s46
      %p50 = pneg %p44
      %p51 = scmp.eq.s32.totalorder %s21, 1
      %p52 = por %p50, %p51
      %p53 = scmp.ne.s32.totalorder %s45, %s48
      %p54 = scmp.eq.s32.totalorder %s21, 0
      %p55 = por %p53, %p54
      %p56 = scmp.ne.s32.totalorder %s45, %s48
      %p57 = scmp.eq.s32.totalorder %s26, 1
      %p58 = por %p56, %p57
      %p59 = scmp.ne.s32.totalorder %s48, %s49
      %p60 = scmp.eq.s32.totalorder %s26, 0
      %p61 = por %p59, %p60
      %p62 = scmp.ne.s32.totalorder %s48, %s49
      %p63 = scmp.eq.s32.totalorder %s27, 1
      %p64 = por %p62, %p63
      %p66 = scmp.ne.s32.totalorder %s49, %s65
      %p67 = scmp.eq.s32.totalorder %s27, 0
      %p68 = por %p66, %p67
      %s70 = sadd.s32 %s69, 1
      %p73 = scmp.eq.s32.totalorder %s21, 1
      %p74 = scmp.ne.s32.totalorder %s69, %s71
      %p75 = scmp.eq.s32.totalorder %s21, 0
      %p76 = por %p74, %p75
      %p77 = scmp.ne.s32.totalorder %s69, %s71
      %p78 = scmp.eq.s32.totalorder %s26, 1
      %p79 = por %p77, %p78
      %p80 = scmp.ne.s32.totalorder %s71, %s72
      %p81 = scmp.eq.s32.totalorder %s26, 0
      %p82 = por %p80, %p81
      %p83 = scmp.ne.s32.totalorder %s71, %s72
      %p84 = scmp.eq.s32.totalorder %s27, 1
      %p85 = por %p83, %p84
      %p87 = scmp.ne.s32.totalorder %s72, %s86
      %p88 = scmp.eq.s32.totalorder %s27, 0
      %p89 = por %p87, %p88
      %s91 = sadd.s32 %s90, 1
      %p94 = scmp.eq.s32.totalorder %s21, 1
      %p95 = scmp.ne.s32.totalorder %s90, %s92
      %p96 = scmp.eq.s32.totalorder %s21, 0
      %p97 = por %p95, %p96
      %p98 = scmp.ne.s32.totalorder %s90, %s92
      %p99 = scmp.eq.s32.totalorder %s26, 1
      %p100 = por %p98, %p99
      %p101 = scmp.ne.s32.totalorder %s92, %s93
      %p102 = scmp.eq.s32.totalorder %s26, 0
      %p103 = por %p101, %p102
      %p104 = scmp.ne.s32.totalorder %s92, %s93
      %p105 = scmp.eq.s32.totalorder %s27, 1
      %p106 = por %p104, %p105
      %p108 = scmp.ne.s32.totalorder %s93, %s107
      %p109 = scmp.eq.s32.totalorder %s27, 0
      %p110 = por %p108, %p109
      %s111 = ssub.s32 %s28, %s40
      %s112 = ssub.s32 %s29, %s36
      %s113 = sor.u32 %s111, %s112
      %p114 = scmp.eq.s32.totalorder %s113, 0
      %s116 = sadd.s32 %s115, 1
      %s117 = scalar_select %p114, %s115, %s116
      %p120 = pneg %p114
      %p121 = scmp.eq.s32.totalorder %s21, 1
      %p122 = por %p120, %p121
      %p123 = scmp.ne.s32.totalorder %s115, %s118
      %p124 = scmp.eq.s32.totalorder %s21, 0
      %p125 = por %p123, %p124
      %p126 = scmp.ne.s32.totalorder %s115, %s118
      %p127 = scmp.eq.s32.totalorder %s26, 1
      %p128 = por %p126, %p127
      %p129 = scmp.ne.s32.totalorder %s118, %s119
      %p130 = scmp.eq.s32.totalorder %s26, 0
      %p131 = por %p129, %p130
      %p132 = scmp.ne.s32.totalorder %s118, %s119
      %p133 = scmp.eq.s32.totalorder %s27, 1
      %p134 = por %p132, %p133
      %p136 = scmp.ne.s32.totalorder %s119, %s135
      %p137 = scmp.eq.s32.totalorder %s27, 0
      %p138 = por %p136, %p137
      %s139 = ssub.s32 %s28, %s40
      %p140 = scmp.eq.s32.totalorder %s139, 0
      %s142 = sadd.s32 %s141, 1
      %s143 = scalar_select %p140, %s141, %s142
      %p146 = pneg %p140
      %p147 = scmp.eq.s32.totalorder %s21, 1
      %p148 = por %p146, %p147
      %p149 = scmp.ne.s32.totalorder %s141, %s144
      %p150 = scmp.eq.s32.totalorder %s21, 0
      %p151 = por %p149, %p150
      %p152 = scmp.ne.s32.totalorder %s141, %s144
      %p153 = scmp.eq.s32.totalorder %s26, 1
      %p154 = por %p152, %p153
      %p155 = scmp.ne.s32.totalorder %s144, %s145
      %p156 = scmp.eq.s32.totalorder %s26, 0
      %p157 = por %p155, %p156
      %p158 = scmp.ne.s32.totalorder %s144, %s145
      %p159 = scmp.eq.s32.totalorder %s27, 1
      %p160 = por %p158, %p159
      %p162 = scmp.ne.s32.totalorder %s145, %s161
      %p163 = scmp.eq.s32.totalorder %s27, 0
      %p164 = por %p162, %p163
      %p165 = scmp.le.s32.totalorder 1, %s21
      %p166 = scmp.lt.s32.totalorder %s21, 3
      %p167 = pnand %p165, %p166
      %p168 = pneg %p167
      // Predicated region
      $region9: #{tpu_custom_call.1} parent=5 // pred_check
        _
      $region10: #{tpu_custom_call.1} parent=5 // pred_check_branch
        %170 = sbr.rel (%p167) target = $region12
      $region11: #{tpu_custom_call.1} parent=5 // pred_region
        %s171 = ssub.s32 %s21, 1
        // Predicated region
        $region13: #{tpu_custom_call.1} parent=11 // pred_check
          %p172 = pneg %p82
        $region14: #{tpu_custom_call.1} parent=11 // pred_check_branch
          %174 = sbr.rel (%p172) target = $region16
        $region15: #{tpu_custom_call.1} parent=11 // pred_region
          %s176 = ssub.s32 1024, 1024
          %177 = vsyncadd [#allocation6], %s176
          %s178 = sshll.u32 [#allocation5], 4
          %s179 = int_to_ptr.vmem [resolvable:$true] %s178
          %184 = dma.hbm_to_vmem [thread:$0]  %s1, 1024, %s179, [#allocation6], 64, 64, 4
        $region16: #{tpu_custom_call.1} parent=11 // pred_fallthru
          _
        // Predicated region
        $region17: #{tpu_custom_call.1} parent=11 // pred_check
          %p185 = pneg %p103
        $region18: #{tpu_custom_call.1} parent=11 // pred_check_branch
          %187 = sbr.rel (%p185) target = $region20
        $region19: #{tpu_custom_call.1} parent=11 // pred_region
          _
        $region20: #{tpu_custom_call.1} parent=11 // pred_fallthru
          _
      $region12: #{tpu_custom_call.1} parent=5 // pred_fallthru
        _
      %p188 = scmp.lt.s32.totalorder %s21, 2
      // Predicated region
      $region21: #{tpu_custom_call.1} parent=5 // pred_check
        %p189 = pneg %p188
      $region22: #{tpu_custom_call.1} parent=5 // pred_check_branch
        %191 = sbr.rel (%p189) target = $region24
      $region23: #{tpu_custom_call.1} parent=5 // pred_region
        // Predicated region
        $region25: #{tpu_custom_call.1} parent=23 // pred_check
          %p192 = pneg %p55
        $region26: #{tpu_custom_call.1} parent=23 // pred_check_branch
          %194 = sbr.rel (%p192) target = $region28
        $region27: #{tpu_custom_call.1} parent=23 // pred_region
          %s195 = sand.u32 %s45, 1
          %s196 = scalar_lea.sflag [#allocation3], %s195
          %s197 = sand.u32 %s45, 1
          %s198 = smul.addr %s197, 128
          %s199 = scalar_lea.vmem [#allocation2], %s198
          %s201 = ssub.s32 2048, 2048
          %202 = vsyncadd %s196, %s201
          %s203 = smul.addr %s29, 32
          %s204 = smul.addr %s28, 32
          %s205 = sadd.s32 %s203, %s204
          %s206 = smul.addr %s205, 64
          %s207 = scalar_lea.hbm %s0, %s206
          %s208 = sshll.u32 %s199, 4
          %s209 = int_to_ptr.vmem [resolvable:$true] %s208
          %214 = dma.hbm_to_vmem [thread:$0]  %s207, 2048, %s209, %s196, 64, 64, 4
        $region28: #{tpu_custom_call.1} parent=23 // pred_fallthru
          _
      $region24: #{tpu_custom_call.1} parent=5 // pred_fallthru
        _
      %p215 = scmp.le.s32.totalorder 1, %s21
      %p216 = scmp.lt.s32.totalorder %s21, 3
      %p217 = pnand %p215, %p216
      %p218 = pneg %p217
      // Predicated region
      $region29: #{tpu_custom_call.1} parent=5 // pred_check
        _
      $region30: #{tpu_custom_call.1} parent=5 // pred_check_branch
        %220 = sbr.rel (%p217) target = $region32
      $region31: #{tpu_custom_call.1} parent=5 // pred_region
        %s221 = ssub.s32 %s21, 1
        %s222 = sand.u32 %s48, 1
        %s223 = scalar_lea.sflag [#allocation3], %s222
        %s224 = sand.u32 %s48, 1
        %s225 = smul.addr %s224, 128
        %s226 = scalar_lea.vmem [#allocation2], %s225
        // Predicated region
        $region33: #{tpu_custom_call.1} parent=31 // pred_check
          %p227 = pneg %p61
        $region34: #{tpu_custom_call.1} parent=31 // pred_check_branch
          %229 = sbr.rel (%p227) target = $region36
        $region35: #{tpu_custom_call.1} parent=31 // pred_region
          %230 = dma.done %s223, 2048
        $region36: #{tpu_custom_call.1} parent=31 // pred_fallthru
          _
        // Predicated region
        $region37: #{tpu_custom_call.1} parent=31 // pred_check
          %p231 = pneg %p82
        $region38: #{tpu_custom_call.1} parent=31 // pred_check_branch
          %233 = sbr.rel (%p231) target = $region40
        $region39: #{tpu_custom_call.1} parent=31 // pred_region
          %234 = dma.done [#allocation6], 1024
        $region40: #{tpu_custom_call.1} parent=31 // pred_fallthru
          _
        %s235 = sand.u32 %s48, 1
        %s236 = scalar_lea.sflag [#allocation3], %s235
        %s237 = sand.u32 %s48, 1
        %s238 = smul.addr %s237, 128
        %s239 = scalar_lea.vmem [#allocation2], %s238
        %p240 = pneg %p61
        %p241 = pneg %p58
        %p242 = pneg %p82
        %p243 = pneg %p79
        %p244 = pneg %p103
        %p245 = pneg %p100
        %p246 = pneg %p131
        %p247 = pneg %p128
        %s248 = sand.u32 %s118, 1
        %s249 = scalar_lea.sflag [#allocation4], %s248
        %s250 = sand.u32 %s118, 1
        %s251 = smul.addr %s250, 128
        %s252 = scalar_lea.vmem [#allocation7], %s251
        %p253 = pneg %p157
        %p254 = pneg %p154
        %s255 = sand.u32 %s144, 1
        %s256 = scalar_lea.sflag [#allocation9], %s255
        %s257 = sand.u32 %s144, 1
        %s258 = scalar_lea.vmem [#allocation8], %s257
        %s259 = smul.u32 32, %s31
        %v261 = vld [vmem:[%s226] sm:$0xf]
        %v262 = vld [vmem:[%s226 + $0x4] sm:$0xf]
        %v263 = vld [vmem:[%s226 + $0x8] sm:$0xf]
        %v264 = vld [vmem:[%s226 + $0xc] sm:$0xf]
        %v265 = vld [vmem:[%s226 + $0x10] sm:$0xf]
        %v266 = vld [vmem:[%s226 + $0x14] sm:$0xf]
        %v267 = vld [vmem:[%s226 + $0x18] sm:$0xf]
        %v268 = vld [vmem:[%s226 + $0x1c] sm:$0xf]
        %v269 = vld [vmem:[%s226 + $0x20] sm:$0xf]
        %v270 = vld [vmem:[%s226 + $0x24] sm:$0xf]
        %v271 = vld [vmem:[%s226 + $0x28] sm:$0xf]
        %v272 = vld [vmem:[%s226 + $0x2c] sm:$0xf]
        %v273 = vld [vmem:[%s226 + $0x30] sm:$0xf]
        %v274 = vld [vmem:[%s226 + $0x34] sm:$0xf]
        %v275 = vld [vmem:[%s226 + $0x38] sm:$0xf]
        %v276 = vld [vmem:[%s226 + $0x3c] sm:$0xf]
        %v277 = vld [vmem:[%s226 + $0x40] sm:$0xf]
        %v278 = vld [vmem:[%s226 + $0x44] sm:$0xf]
        %v279 = vld [vmem:[%s226 + $0x48] sm:$0xf]
        %v280 = vld [vmem:[%s226 + $0x4c] sm:$0xf]
        %v281 = vld [vmem:[%s226 + $0x50] sm:$0xf]
        %v282 = vld [vmem:[%s226 + $0x54] sm:$0xf]
        %v283 = vld [vmem:[%s226 + $0x58] sm:$0xf]
        %v284 = vld [vmem:[%s226 + $0x5c] sm:$0xf]
        %v285 = vld [vmem:[%s226 + $0x60] sm:$0xf]
        %v286 = vld [vmem:[%s226 + $0x64] sm:$0xf]
        %v287 = vld [vmem:[%s226 + $0x68] sm:$0xf]
        %v288 = vld [vmem:[%s226 + $0x6c] sm:$0xf]
        %v289 = vld [vmem:[%s226 + $0x70] sm:$0xf]
        %v290 = vld [vmem:[%s226 + $0x74] sm:$0xf]
        %v291 = vld [vmem:[%s226 + $0x78] sm:$0xf]
        %v292 = vld [vmem:[%s226 + $0x7c] sm:$0xf]
        %v293 = vld [vmem:[#allocation5] sm:$0xf]
        %v294 = vld [vmem:[#allocation5 + $0x4] sm:$0xf]
        %v295 = vld [vmem:[#allocation5 + $0x8] sm:$0xf]
        %v296 = vld [vmem:[#allocation5 + $0xc] sm:$0xf]
        %v297 = vld [vmem:[#allocation5 + $0x10] sm:$0xf]
        %v298 = vld [vmem:[#allocation5 + $0x14] sm:$0xf]
        %v299 = vld [vmem:[#allocation5 + $0x18] sm:$0xf]
        %v300 = vld [vmem:[#allocation5 + $0x1c] sm:$0xf]
        %v301 = vld [vmem:[#allocation5 + $0x20] sm:$0xf]
        %v302 = vld [vmem:[#allocation5 + $0x24] sm:$0xf]
        %v303 = vld [vmem:[#allocation5 + $0x28] sm:$0xf]
        %v304 = vld [vmem:[#allocation5 + $0x2c] sm:$0xf]
        %v305 = vld [vmem:[#allocation5 + $0x30] sm:$0xf]
        %v306 = vld [vmem:[#allocation5 + $0x34] sm:$0xf]
        %v307 = vld [vmem:[#allocation5 + $0x38] sm:$0xf]
        %v308 = vld [vmem:[#allocation5 + $0x3c] sm:$0xf]
        %v309 = vld [vmem:[%s2] sm:$0x1]
        %v311 = vlaneseq
        %v312 = vshrl.u32 %v311, 7
        %v313 = vsub.s32 0, %v312
        %v314 = vrot.slane %v309, %v313
        %v348 = vunpack.c.l.b16 %v261
        %v349 = vunpack.c.l.b16 %v262
        %v350 = vunpack.c.l.b16 %v263
        %v351 = vunpack.c.l.b16 %v264
        %v352 = vunpack.c.l.b16 %v265
        %v353 = vunpack.c.l.b16 %v266
        %v354 = vunpack.c.l.b16 %v267
        %v355 = vunpack.c.l.b16 %v268
        %v356 = vunpack.c.l.b16 %v269
        %v357 = vunpack.c.l.b16 %v270
        %v358 = vunpack.c.l.b16 %v271
        %v359 = vunpack.c.l.b16 %v272
        %v360 = vunpack.c.l.b16 %v273
        %v361 = vunpack.c.l.b16 %v274
        %v362 = vunpack.c.l.b16 %v275
        %v363 = vunpack.c.l.b16 %v276
        %v364 = vunpack.c.l.b16 %v277
        %v365 = vunpack.c.l.b16 %v278
        %v366 = vunpack.c.l.b16 %v279
        %v367 = vunpack.c.l.b16 %v280
        %v368 = vunpack.c.l.b16 %v281
        %v369 = vunpack.c.l.b16 %v282
        %v370 = vunpack.c.l.b16 %v283
        %v371 = vunpack.c.l.b16 %v284
        %v372 = vunpack.c.l.b16 %v285
        %v373 = vunpack.c.l.b16 %v286
        %v374 = vunpack.c.l.b16 %v287
        %v375 = vunpack.c.l.b16 %v288
        %v376 = vunpack.c.l.b16 %v289
        %v377 = vunpack.c.l.b16 %v290
        %v378 = vunpack.c.l.b16 %v291
        %v379 = vunpack.c.l.b16 %v292
        %v380 = vpack.c.b16 %v349, %v348
        %v381 = vpack.c.b16 %v351, %v350
        %v382 = vpack.c.b16 %v353, %v352
        %v383 = vpack.c.b16 %v355, %v354
        %v384 = vpack.c.b16 %v357, %v356
        %v385 = vpack.c.b16 %v359, %v358
        %v386 = vpack.c.b16 %v361, %v360
        %v387 = vpack.c.b16 %v363, %v362
        %v388 = vpack.c.b16 %v365, %v364
        %v389 = vpack.c.b16 %v367, %v366
        %v390 = vpack.c.b16 %v369, %v368
        %v391 = vpack.c.b16 %v371, %v370
        %v392 = vpack.c.b16 %v373, %v372
        %v393 = vpack.c.b16 %v375, %v374
        %v394 = vpack.c.b16 %v377, %v376
        %v395 = vpack.c.b16 %v379, %v378
        %v428 = vunpack.c.l.b16 %v293
        %v429 = vunpack.c.l.b16 %v294
        %v430 = vunpack.c.l.b16 %v295
        %v431 = vunpack.c.l.b16 %v296
        %v432 = vunpack.c.l.b16 %v297
        %v433 = vunpack.c.l.b16 %v298
        %v434 = vunpack.c.l.b16 %v299
        %v435 = vunpack.c.l.b16 %v300
        %v436 = vunpack.c.l.b16 %v301
        %v437 = vunpack.c.l.b16 %v302
        %v438 = vunpack.c.l.b16 %v303
        %v439 = vunpack.c.l.b16 %v304
        %v440 = vunpack.c.l.b16 %v305
        %v441 = vunpack.c.l.b16 %v306
        %v442 = vunpack.c.l.b16 %v307
        %v443 = vunpack.c.l.b16 %v308
        %v444 = vpack.c.b16 %v429, %v428
        %v445 = vpack.c.b16 %v431, %v430
        %v446 = vpack.c.b16 %v433, %v432
        %v447 = vpack.c.b16 %v435, %v434
        %v448 = vpack.c.b16 %v437, %v436
        %v449 = vpack.c.b16 %v439, %v438
        %v450 = vpack.c.b16 %v441, %v440
        %v451 = vpack.c.b16 %v443, %v442
        %460 = vmatprep.subr.bf16.mxu0 0
        %461 = vmatpush1.bf16.msra.mxu0 %v444
        %462 = vmatprep.subr.bf16.mxu0 0
        %463 = vmatpush1.bf16.msra.mxu0 %v445
        %464 = vmatprep.subr.bf16.mxu0 0
        %465 = vmatpush1.bf16.msra.mxu0 %v446
        %466 = vmatprep.subr.bf16.mxu0 0
        %467 = vmatpush1.bf16.msra.mxu0 %v447
        %468 = vmatprep.subr.bf16.mxu0 0
        %469 = vmatpush1.bf16.msra.mxu0 %v448
        %470 = vmatprep.subr.bf16.mxu0 0
        %471 = vmatpush1.bf16.msra.mxu0 %v449
        %472 = vmatprep.subr.bf16.mxu0 0
        %473 = vmatpush1.bf16.msra.mxu0 %v450
        %474 = vmatprep.subr.bf16.mxu0 0
        %475 = vmatpush1.bf16.msra.mxu0 %v451
        %476 = vmatprep.subr.bf16.mxu0 0
        %477 = vmatpush1.bf16.msra.mxu0 0
        %478 = vmatprep.subr.bf16.mxu0 0
        %479 = vmatpush1.bf16.msra.mxu0 0
        %480 = vmatprep.subr.bf16.mxu0 0
        %481 = vmatpush1.bf16.msra.mxu0 0
        %482 = vmatprep.subr.bf16.mxu0 0
        %483 = vmatpush1.bf16.msra.mxu0 0
        %484 = vmatprep.subr.bf16.mxu0 0
        %485 = vmatpush1.bf16.msra.mxu0 0
        %486 = vmatprep.subr.bf16.mxu0 0
        %487 = vmatpush1.bf16.msra.mxu0 0
        %488 = vmatprep.subr.bf16.mxu0 0
        %489 = vmatpush1.bf16.msra.mxu0 0
        %490 = vmatprep.subr.bf16.mxu0 0
        %491 = vmatpush1.bf16.msra.mxu0 0
        %492 = vmatprep.mubr.bf16.mxu0 0
        %493 = vmatmul.mubr.bf16.gmra.mrb[0].mxu0 %v380
        %v494 = vpop.f32.mrb[0].mxu0
        %v495 = vadd.f32 %v314, %v494
        %v496 = vpop.f32.mrb[0].mxu0
        %v497 = vpop.f32.mrb[0].mxu0
        %v498 = vadd.f32 %v314, %v497
        %v499 = vpop.f32.mrb[0].mxu0
        %500 = vmatprep.mubr.bf16.mxu0 0
        %501 = vmatmul.mubr.bf16.gmra.mrb[0].mxu0 %v381
        %v502 = vpop.f32.mrb[0].mxu0
        %v503 = vadd.f32 %v314, %v502
        %v504 = vpop.f32.mrb[0].mxu0
        %v505 = vpop.f32.mrb[0].mxu0
        %v506 = vadd.f32 %v314, %v505
        %v507 = vpop.f32.mrb[0].mxu0
        %508 = vmatprep.mubr.bf16.mxu0 0
        %509 = vmatmul.mubr.bf16.gmra.mrb[0].mxu0 %v382
        %v510 = vpop.f32.mrb[0].mxu0
        %v511 = vadd.f32 %v314, %v510
        %v512 = vpop.f32.mrb[0].mxu0
        %v513 = vpop.f32.mrb[0].mxu0
        %v514 = vadd.f32 %v314, %v513
        %v515 = vpop.f32.mrb[0].mxu0
        %516 = vmatprep.mubr.bf16.mxu0 0
        %517 = vmatmul.mubr.bf16.gmra.mrb[0].mxu0 %v383
        %v518 = vpop.f32.mrb[0].mxu0
        %v519 = vadd.f32 %v314, %v518
        %v520 = vpop.f32.mrb[0].mxu0
        %v521 = vpop.f32.mrb[0].mxu0
        %v522 = vadd.f32 %v314, %v521
        %v523 = vpop.f32.mrb[0].mxu0
        %524 = vmatprep.mubr.bf16.mxu0 0
        %525 = vmatmul.mubr.bf16.gmra.mrb[0].mxu0 %v384
        %v526 = vpop.f32.mrb[0].mxu0
        %v527 = vadd.f32 %v314, %v526
        %v528 = vpop.f32.mrb[0].mxu0
        %v529 = vpop.f32.mrb[0].mxu0
        %v530 = vadd.f32 %v314, %v529
        %v531 = vpop.f32.mrb[0].mxu0
        %532 = vmatprep.mubr.bf16.mxu0 0
        %533 = vmatmul.mubr.bf16.gmra.mrb[0].mxu0 %v385
        %v534 = vpop.f32.mrb[0].mxu0
        %v535 = vadd.f32 %v314, %v534
        %v536 = vpop.f32.mrb[0].mxu0
        %v537 = vpop.f32.mrb[0].mxu0
        %v538 = vadd.f32 %v314, %v537
        %v539 = vpop.f32.mrb[0].mxu0
        %540 = vmatprep.mubr.bf16.mxu0 0
        %541 = vmatmul.mubr.bf16.gmra.mrb[0].mxu0 %v386
        %v542 = vpop.f32.mrb[0].mxu0
        %v543 = vadd.f32 %v314, %v542
        %v544 = vpop.f32.mrb[0].mxu0
        %v545 = vpop.f32.mrb[0].mxu0
        %v546 = vadd.f32 %v314, %v545
        %v547 = vpop.f32.mrb[0].mxu0
        %548 = vmatprep.mubr.bf16.mxu0 0
        %549 = vmatmul.mubr.bf16.gmra.mrb[0].mxu0 %v387
        %v550 = vpop.f32.mrb[0].mxu0
        %v551 = vadd.f32 %v314, %v550
        %v552 = vpop.f32.mrb[0].mxu0
        %v553 = vpop.f32.mrb[0].mxu0
        %v554 = vadd.f32 %v314, %v553
        %v555 = vpop.f32.mrb[0].mxu0
        %556 = vmatprep.mubr.bf16.mxu0 0
        %557 = vmatmul.mubr.bf16.gmra.mrb[0].mxu0 %v388
        %v558 = vpop.f32.mrb[0].mxu0
        %v559 = vadd.f32 %v314, %v558
        %v560 = vpop.f32.mrb[0].mxu0
        %v561 = vpop.f32.mrb[0].mxu0
        %v562 = vadd.f32 %v314, %v561
        %v563 = vpop.f32.mrb[0].mxu0
        %564 = vmatprep.mubr.bf16.mxu0 0
        %565 = vmatmul.mubr.bf16.gmra.mrb[0].mxu0 %v389
        %v566 = vpop.f32.mrb[0].mxu0
        %v567 = vadd.f32 %v314, %v566
        %v568 = vpop.f32.mrb[0].mxu0
        %v569 = vpop.f32.mrb[0].mxu0
        %v570 = vadd.f32 %v314, %v569
        %v571 = vpop.f32.mrb[0].mxu0
        %572 = vmatprep.mubr.bf16.mxu0 0
        %573 = vmatmul.mubr.bf16.gmra.mrb[0].mxu0 %v390
        %v574 = vpop.f32.mrb[0].mxu0
        %v575 = vadd.f32 %v314, %v574
        %v576 = vpop.f32.mrb[0].mxu0
        %v577 = vpop.f32.mrb[0].mxu0
        %v578 = vadd.f32 %v314, %v577
        %v579 = vpop.f32.mrb[0].mxu0
        %580 = vmatprep.mubr.bf16.mxu0 0
        %581 = vmatmul.mubr.bf16.gmra.mrb[0].mxu0 %v391
        %v582 = vpop.f32.mrb[0].mxu0
        %v583 = vadd.f32 %v314, %v582
        %v584 = vpop.f32.mrb[0].mxu0
        %v585 = vpop.f32.mrb[0].mxu0
        %v586 = vadd.f32 %v314, %v585
        %v587 = vpop.f32.mrb[0].mxu0
        %588 = vmatprep.mubr.bf16.mxu0 0
        %589 = vmatmul.mubr.bf16.gmra.mrb[0].mxu0 %v392
        %v590 = vpop.f32.mrb[0].mxu0
        %v591 = vadd.f32 %v314, %v590
        %v592 = vpop.f32.mrb[0].mxu0
        %v593 = vpop.f32.mrb[0].mxu0
        %v594 = vadd.f32 %v314, %v593
        %v595 = vpop.f32.mrb[0].mxu0
        %596 = vmatprep.mubr.bf16.mxu0 0
        %597 = vmatmul.mubr.bf16.gmra.mrb[0].mxu0 %v393
        %v598 = vpop.f32.mrb[0].mxu0
        %v599 = vadd.f32 %v314, %v598
        %v600 = vpop.f32.mrb[0].mxu0
        %v601 = vpop.f32.mrb[0].mxu0
        %v602 = vadd.f32 %v314, %v601
        %v603 = vpop.f32.mrb[0].mxu0
        %604 = vmatprep.mubr.bf16.mxu0 0
        %605 = vmatmul.mubr.bf16.gmra.mrb[0].mxu0 %v394
        %v606 = vpop.f32.mrb[0].mxu0
        %v607 = vadd.f32 %v314, %v606
        %v608 = vpop.f32.mrb[0].mxu0
        %v609 = vpop.f32.mrb[0].mxu0
        %v610 = vadd.f32 %v314, %v609
        %v611 = vpop.f32.mrb[0].mxu0
        %612 = vmatprep.mubr.bf16.mxu0 0
        %613 = vmatmul.mubr.bf16.gmra.mrb[0].mxu0 %v395
        %v614 = vpop.f32.mrb[0].mxu0
        %v615 = vadd.f32 %v314, %v614
        %v616 = vpop.f32.mrb[0].mxu0
        %v617 = vpop.f32.mrb[0].mxu0
        %v618 = vadd.f32 %v314, %v617
        %v619 = vpop.f32.mrb[0].mxu0
        %620 = vdwg.mxu0
        %v621 = vmax.f32 %v495, 0.0
        %v622 = vmax.f32 %v498, 0.0
        %v623 = vmax.f32 %v503, 0.0
        %v624 = vmax.f32 %v506, 0.0
        %v625 = vmax.f32 %v511, 0.0
        %v626 = vmax.f32 %v514, 0.0
        %v627 = vmax.f32 %v519, 0.0
        %v628 = vmax.f32 %v522, 0.0
        %v629 = vmax.f32 %v527, 0.0
        %v630 = vmax.f32 %v530, 0.0
        %v631 = vmax.f32 %v535, 0.0
        %v632 = vmax.f32 %v538, 0.0
        %v633 = vmax.f32 %v543, 0.0
        %v634 = vmax.f32 %v546, 0.0
        %v635 = vmax.f32 %v551, 0.0
        %v636 = vmax.f32 %v554, 0.0
        %v637 = vmax.f32 %v559, 0.0
        %v638 = vmax.f32 %v562, 0.0
        %v639 = vmax.f32 %v567, 0.0
        %v640 = vmax.f32 %v570, 0.0
        %v641 = vmax.f32 %v575, 0.0
        %v642 = vmax.f32 %v578, 0.0
        %v643 = vmax.f32 %v583, 0.0
        %v644 = vmax.f32 %v586, 0.0
        %v645 = vmax.f32 %v591, 0.0
        %v646 = vmax.f32 %v594, 0.0
        %v647 = vmax.f32 %v599, 0.0
        %v648 = vmax.f32 %v602, 0.0
        %v649 = vmax.f32 %v607, 0.0
        %v650 = vmax.f32 %v610, 0.0
        %v651 = vmax.f32 %v615, 0.0
        %v652 = vmax.f32 %v618, 0.0
        %v653 = vpack.c.bf16 %v622, %v621
        %v654 = vpack.c.bf16 %v624, %v623
        %v655 = vpack.c.bf16 %v626, %v625
        %v656 = vpack.c.bf16 %v628, %v627
        %v657 = vpack.c.bf16 %v630, %v629
        %v658 = vpack.c.bf16 %v632, %v631
        %v659 = vpack.c.bf16 %v634, %v633
        %v660 = vpack.c.bf16 %v636, %v635
        %v661 = vpack.c.bf16 %v638, %v637
        %v662 = vpack.c.bf16 %v640, %v639
        %v663 = vpack.c.bf16 %v642, %v641
        %v664 = vpack.c.bf16 %v644, %v643
        %v665 = vpack.c.bf16 %v646, %v645
        %v666 = vpack.c.bf16 %v648, %v647
        %v667 = vpack.c.bf16 %v650, %v649
        %v668 = vpack.c.bf16 %v652, %v651
        %v685 = vunpack.c.l.b16 %v653
        %v686 = vunpack.c.h.b16 %v653
        %v687 = vunpack.c.l.b16 %v654
        %v688 = vunpack.c.h.b16 %v654
        %v689 = vunpack.c.l.b16 %v655
        %v690 = vunpack.c.h.b16 %v655
        %v691 = vunpack.c.l.b16 %v656
        %v692 = vunpack.c.h.b16 %v656
        %v693 = vunpack.c.l.b16 %v657
        %v694 = vunpack.c.h.b16 %v657
        %v695 = vunpack.c.l.b16 %v658
        %v696 = vunpack.c.h.b16 %v658
        %v697 = vunpack.c.l.b16 %v659
        %v698 = vunpack.c.h.b16 %v659
        %v699 = vunpack.c.l.b16 %v660
        %v700 = vunpack.c.h.b16 %v660
        %v701 = vunpack.c.l.b16 %v661
        %v702 = vunpack.c.h.b16 %v661
        %v703 = vunpack.c.l.b16 %v662
        %v704 = vunpack.c.h.b16 %v662
        %v705 = vunpack.c.l.b16 %v663
        %v706 = vunpack.c.h.b16 %v663
        %v707 = vunpack.c.l.b16 %v664
        %v708 = vunpack.c.h.b16 %v664
        %v709 = vunpack.c.l.b16 %v665
        %v710 = vunpack.c.h.b16 %v665
        %v711 = vunpack.c.l.b16 %v666
        %v712 = vunpack.c.h.b16 %v666
        %v713 = vunpack.c.l.b16 %v667
        %v714 = vunpack.c.h.b16 %v667
        %v715 = vunpack.c.l.b16 %v668
        %v716 = vunpack.c.h.b16 %v668
        %v717 = vpack.c.b16 %v685, %v685
        %v718 = vpack.c.b16 %v686, %v686
        %v719 = vpack.c.b16 %v687, %v687
        %v720 = vpack.c.b16 %v688, %v688
        %v721 = vpack.c.b16 %v689, %v689
        %v722 = vpack.c.b16 %v690, %v690
        %v723 = vpack.c.b16 %v691, %v691
        %v724 = vpack.c.b16 %v692, %v692
        %v725 = vpack.c.b16 %v693, %v693
        %v726 = vpack.c.b16 %v694, %v694
        %v727 = vpack.c.b16 %v695, %v695
        %v728 = vpack.c.b16 %v696, %v696
        %v729 = vpack.c.b16 %v697, %v697
        %v730 = vpack.c.b16 %v698, %v698
        %v731 = vpack.c.b16 %v699, %v699
        %v732 = vpack.c.b16 %v700, %v700
        %v733 = vpack.c.b16 %v701, %v701
        %v734 = vpack.c.b16 %v702, %v702
        %v735 = vpack.c.b16 %v703, %v703
        %v736 = vpack.c.b16 %v704, %v704
        %v737 = vpack.c.b16 %v705, %v705
        %v738 = vpack.c.b16 %v706, %v706
        %v739 = vpack.c.b16 %v707, %v707
        %v740 = vpack.c.b16 %v708, %v708
        %v741 = vpack.c.b16 %v709, %v709
        %v742 = vpack.c.b16 %v710, %v710
        %v743 = vpack.c.b16 %v711, %v711
        %v744 = vpack.c.b16 %v712, %v712
        %v745 = vpack.c.b16 %v713, %v713
        %v746 = vpack.c.b16 %v714, %v714
        %v747 = vpack.c.b16 %v715, %v715
        %v748 = vpack.c.b16 %v716, %v716
        %781 = vst [vmem:[%s252] sm:$0xf] %v717
        %782 = vst [vmem:[%s252 + $0x4] sm:$0xf] %v718
        %783 = vst [vmem:[%s252 + $0x8] sm:$0xf] %v719
        %784 = vst [vmem:[%s252 + $0xc] sm:$0xf] %v720
        %785 = vst [vmem:[%s252 + $0x10] sm:$0xf] %v721
        %786 = vst [vmem:[%s252 + $0x14] sm:$0xf] %v722
        %787 = vst [vmem:[%s252 + $0x18] sm:$0xf] %v723
        %788 = vst [vmem:[%s252 + $0x1c] sm:$0xf] %v724
        %789 = vst [vmem:[%s252 + $0x20] sm:$0xf] %v725
        %790 = vst [vmem:[%s252 + $0x24] sm:$0xf] %v726
        %791 = vst [vmem:[%s252 + $0x28] sm:$0xf] %v727
        %792 = vst [vmem:[%s252 + $0x2c] sm:$0xf] %v728
        %793 = vst [vmem:[%s252 + $0x30] sm:$0xf] %v729
        %794 = vst [vmem:[%s252 + $0x34] sm:$0xf] %v730
        %795 = vst [vmem:[%s252 + $0x38] sm:$0xf] %v731
        %796 = vst [vmem:[%s252 + $0x3c] sm:$0xf] %v732
        %797 = vst [vmem:[%s252 + $0x40] sm:$0xf] %v733
        %798 = vst [vmem:[%s252 + $0x44] sm:$0xf] %v734
        %799 = vst [vmem:[%s252 + $0x48] sm:$0xf] %v735
        %800 = vst [vmem:[%s252 + $0x4c] sm:$0xf] %v736
        %801 = vst [vmem:[%s252 + $0x50] sm:$0xf] %v737
        %802 = vst [vmem:[%s252 + $0x54] sm:$0xf] %v738
        %803 = vst [vmem:[%s252 + $0x58] sm:$0xf] %v739
        %804 = vst [vmem:[%s252 + $0x5c] sm:$0xf] %v740
        %805 = vst [vmem:[%s252 + $0x60] sm:$0xf] %v741
        %806 = vst [vmem:[%s252 + $0x64] sm:$0xf] %v742
        %807 = vst [vmem:[%s252 + $0x68] sm:$0xf] %v743
        %808 = vst [vmem:[%s252 + $0x6c] sm:$0xf] %v744
        %809 = vst [vmem:[%s252 + $0x70] sm:$0xf] %v745
        %810 = vst [vmem:[%s252 + $0x74] sm:$0xf] %v746
        %811 = vst [vmem:[%s252 + $0x78] sm:$0xf] %v747
        %812 = vst [vmem:[%s252 + $0x7c] sm:$0xf] %v748
        %p813 = scmp.eq.s32.totalorder %s31, 0
        // Predicated region
        $region41: #{tpu_custom_call.1} parent=31 // pred_check
          %p814 = pneg %p813
        $region42: #{tpu_custom_call.1} parent=31 // pred_check_branch
          %816 = sbr.rel (%p814) target = $region44
        $region43: #{tpu_custom_call.1} parent=31 // pred_region
          %817 = vst [vmem:[%s258] sm:$0x1] 0.0
        $region44: #{tpu_custom_call.1} parent=31 // pred_fallthru
          _
        %v818 = vld [vmem:[%s258] sm:$0x1]
        %v819 = vadd.f32 %v621, %v622
        %v820 = vadd.f32 %v819, %v623
        %v821 = vadd.f32 %v820, %v624
        %v822 = vadd.f32 %v821, %v625
        %v823 = vadd.f32 %v822, %v626
        %v824 = vadd.f32 %v823, %v627
        %v825 = vadd.f32 %v824, %v628
        %v826 = vadd.f32 %v825, %v629
        %v827 = vadd.f32 %v826, %v630
        %v828 = vadd.f32 %v827, %v631
        %v829 = vadd.f32 %v828, %v632
        %v830 = vadd.f32 %v829, %v633
        %v831 = vadd.f32 %v830, %v634
        %v832 = vadd.f32 %v831, %v635
        %v833 = vadd.f32 %v832, %v636
        %v834 = vadd.f32 %v833, %v637
        %v835 = vadd.f32 %v834, %v638
        %v836 = vadd.f32 %v835, %v639
        %v837 = vadd.f32 %v836, %v640
        %v838 = vadd.f32 %v837, %v641
        %v839 = vadd.f32 %v838, %v642
        %v840 = vadd.f32 %v839, %v643
        %v841 = vadd.f32 %v840, %v644
        %v842 = vadd.f32 %v841, %v645
        %v843 = vadd.f32 %v842, %v646
        %v844 = vadd.f32 %v843, %v647
        %v845 = vadd.f32 %v844, %v648
        %v846 = vadd.f32 %v845, %v649
        %v847 = vadd.f32 %v846, %v650
        %v848 = vadd.f32 %v847, %v651
        %v849 = vadd.f32 %v848, %v652
        %v850 = vrot.slane %v849, 4
        %v851 = vadd.f32 %v849, %v850
        %v852 = vrot.slane %v851, 2
        %v853 = vadd.f32 %v851, %v852
        %v854 = vrot.slane %v853, 1
        %v855 = vadd.f32 %v853, %v854
        %v856 = vadd.f32 %v818, %v855
        %857 = vst [vmem:[%s258] sm:$0x1] %v856
        // Predicated region
        $region45: #{tpu_custom_call.1} parent=31 // pred_check
          %p858 = pneg %p813
        $region46: #{tpu_custom_call.1} parent=31 // pred_check_branch
          %860 = sbr.rel (%p858) target = $region48
        $region47: #{tpu_custom_call.1} parent=31 // pred_region
          %v861 = vld [vmem:[%s258] sm:$0x1]
          %v862 = vmul.f32 %v861, 0.00390625
          %863 = vst [vmem:[%s258] sm:$0x1] %v862
        $region48: #{tpu_custom_call.1} parent=31 // pred_fallthru
          _
        %s864 = sand.u32 %s118, 1
        %s865 = scalar_lea.sflag [#allocation4], %s864
        %s866 = sand.u32 %s118, 1
        %s867 = smul.addr %s866, 128
        %s868 = scalar_lea.vmem [#allocation7], %s867
        %s869 = sand.u32 %s144, 1
        %s870 = scalar_lea.sflag [#allocation9], %s869
        %s871 = sand.u32 %s144, 1
        %s872 = scalar_lea.vmem [#allocation8], %s871
        // Predicated region
        $region49: #{tpu_custom_call.1} parent=31 // pred_check
          %p873 = pneg %p128
        $region50: #{tpu_custom_call.1} parent=31 // pred_check_branch
          %875 = sbr.rel (%p873) target = $region52
        $region51: #{tpu_custom_call.1} parent=31 // pred_region
          %s876 = smul.u32 32, %s31
          %s878 = ssub.s32 2048, 2048
          %879 = vsyncadd %s865, %s878
          %s880 = smul.addr %s30, 32
          %s881 = sadd.s32 %s876, %s880
          %s882 = smul.addr %s881, 64
          %s883 = scalar_lea.hbm %s3, %s882
          %s884 = sshll.u32 %s868, 4
          %s885 = int_to_ptr.vmem [resolvable:$true] %s884
          %890 = dma.vmem_to_hbm [thread:$0]  %s885, 2048, %s883, %s865, 64, 64, 4
        $region52: #{tpu_custom_call.1} parent=31 // pred_fallthru
          _
        // Predicated region
        $region53: #{tpu_custom_call.1} parent=31 // pred_check
          %p891 = pneg %p154
        $region54: #{tpu_custom_call.1} parent=31 // pred_check_branch
          %893 = sbr.rel (%p891) target = $region56
        $region55: #{tpu_custom_call.1} parent=31 // pred_region
          %s895 = ssub.s32 16, 16
          %896 = vsyncadd %s870, %s895
          %s897 = smul.addr %s30, 16
          %s898 = scalar_lea.hbm %s4, %s897
          %s900 = sshll.u32 %s872, 4
          %s901 = int_to_ptr.vmem [resolvable:$true] %s900
          %903 = dma.vmem_to_hbm [thread:$0]  %s901, 16, %s898, %s870
        $region56: #{tpu_custom_call.1} parent=31 // pred_fallthru
          _
      $region32: #{tpu_custom_call.1} parent=5 // pred_fallthru
        _
      %p904 = scmp.le.s32.totalorder 2, %s21
      // Predicated region
      $region57: #{tpu_custom_call.1} parent=5 // pred_check
        %p905 = pneg %p904
      $region58: #{tpu_custom_call.1} parent=5 // pred_check_branch
        %907 = sbr.rel (%p905) target = $region60
      $region59: #{tpu_custom_call.1} parent=5 // pred_region
        %s908 = ssub.s32 %s21, 2
        // Predicated region
        $region61: #{tpu_custom_call.1} parent=59 // pred_check
          %p909 = pneg %p134
        $region62: #{tpu_custom_call.1} parent=59 // pred_check_branch
          %911 = sbr.rel (%p909) target = $region64
        $region63: #{tpu_custom_call.1} parent=59 // pred_region
          %s912 = sand.u32 %s119, 1
          %s913 = scalar_lea.sflag [#allocation4], %s912
          %s914 = sand.u32 %s119, 1
          %s915 = smul.addr %s914, 128
          %s916 = scalar_lea.vmem [#allocation7], %s915
          %917 = dma.done %s913, 2048
        $region64: #{tpu_custom_call.1} parent=59 // pred_fallthru
          _
        // Predicated region
        $region65: #{tpu_custom_call.1} parent=59 // pred_check
          %p918 = pneg %p160
        $region66: #{tpu_custom_call.1} parent=59 // pred_check_branch
          %920 = sbr.rel (%p918) target = $region68
        $region67: #{tpu_custom_call.1} parent=59 // pred_region
          %s921 = sand.u32 %s145, 1
          %s922 = scalar_lea.sflag [#allocation9], %s921
          %s923 = sand.u32 %s145, 1
          %s924 = scalar_lea.vmem [#allocation8], %s923
          %925 = dma.done %s922, 16
        $region68: #{tpu_custom_call.1} parent=59 // pred_fallthru
          _
      $region60: #{tpu_custom_call.1} parent=5 // pred_fallthru
        _
    $region6: #{tpu_custom_call.1} parent=1 // loop_footer
      %s25 = sadd.s32 1, %s21
    $region7: #{tpu_custom_call.1} parent=1 // loop_footer_branch
      %20 = sbr.rel target = $region3
    $region8: #{tpu_custom_call.1} parent=1 // loop_exit
      _
    %926 = vsyncpa [#allocation3], 1
    %s927 = scalar_lea.sflag [#allocation3], 1
    %928 = vsyncpa %s927, 1
    %929 = vsyncpa [#allocation6], 1
    %930 = vsyncpa [#allocation4], 1
    %s931 = scalar_lea.sflag [#allocation4], 1
    %932 = vsyncpa %s931, 1
    %933 = vsyncpa [#allocation9], 1
    %s934 = scalar_lea.sflag [#allocation9], 1
    %935 = vsyncpa %s934, 1

</llo_original>
